<compile_context>
chip_gen: v5e
topology: v5e:2x2
jax: 0.10.0
libtpu: 0.0.40
codegen_flags: <defaults>
</compile_context>

<pallas_src>
import jax
import jax.numpy as jnp
from jax.experimental import pallas as pl
from jax.experimental.pallas import tpu as pltpu


def _round_up(x, m):
    return ((x + m - 1) // m) * m


def _make_kernel(guard_h):
    """Build the fused MLP kernel.

    guard_h=True: the fc1 activation is computed only at output-tile index
    j == 0 and reused across the output-tile axis via the VMEM scratch.
    CORRECTNESS INVARIANT: this requires j to be the innermost,
    sequentially-iterated ("arbitrary") grid axis. Do NOT mark j "parallel"
    when guard_h is True (the wrapper enforces this).
    """
    def kernel(x_ref, w1_ref, b1_ref, w2_ref, b2_ref, o_ref, h_ref):
        # x_ref:  (tm, D_in)       batch tile
        # w1_ref: (D_in, H)        fc1.weight^T  (resident, single-buffered)
        # b1_ref: (1, H)  f32
        # w2_ref: (H, tn)          fc2.weight^T  (resident or streamed along j)
        # b2_ref: (1, tn) f32
        # o_ref:  (tm, tn)
        # h_ref:  (tm, H)          fc1 activation scratch (weight dtype)

        def compute_h():
            x = x_ref[...].astype(w1_ref.dtype)
            h = jnp.dot(x, w1_ref[...], preferred_element_type=jnp.float32)
            h = h + b1_ref[...]                    # f32 bias add (VPU)
            h = jnp.where(h > 0, h, 0.01 * h)      # LeakyReLU(0.01), f32
            h_ref[...] = h.astype(h_ref.dtype)     # single cast to MXU dtype

        if guard_h:
            pl.when(pl.program_id(1) == 0)(compute_h)
        else:
            compute_h()

        y = jnp.dot(h_ref[...], w2_ref[...], preferred_element_type=jnp.float32)
        o_ref[...] = (y + b2_ref[...]).astype(o_ref.dtype)

    return kernel


def watermark_insert(x, w1_t, b1, w2_t, b2, *, tm=128, max_tn=None,
                     weight_dtype=None, split_small_batch=True, w2_buffers=2):
    """Forward pass of Watermark_insert (y = LeakyReLU(x @ W1^T + b1) @ W2^T + b2).

    x:    (B, D_in)   float32
    w1_t: (D_in, H)   fc1.weight.T
    b1:   (H,)        fc1.bias
    w2_t: (H, D_out)  fc2.weight.T
    b2:   (D_out,)    fc2.bias

    tm:           batch tile (128 default; 256 can help large-B on v6e/v7x if
                  the VMEM budget allows — re-check on v7x's 64 MiB).
    max_tn:       optional cap on the output-feature tile (forces streaming w2).
    weight_dtype: e.g. jnp.bfloat16 for the MXU operands + fc1 scratch;
                  accumulation and elementwise math stay f32. Recommended on
                  all generations (v5e included — it is weight-BW bound here).
    w2_buffers:   pipeline depth for streamed w2 tiles (3 can help v5e if the
                  w2 DMA is exposed).
    """
    B, D_in = x.shape
    D_in_w, H = w1_t.shape
    H_w, D_out = w2_t.shape
    assert D_in_w == D_in and H_w == H

    if weight_dtype is not None:
        w1_t = w1_t.astype(weight_dtype)
        w2_t = w2_t.astype(weight_dtype)
    b1_2d = b1.astype(jnp.float32).reshape(1, H)
    b2_2d = b2.astype(jnp.float32).reshape(1, D_out)

    xbytes = x.dtype.itemsize
    wbytes = w1_t.dtype.itemsize
    hbytes = wbytes                 # fc1-activation scratch stored in weight dtype
    obytes = xbytes

    # ------------------------- batch tiling -------------------------
    if B <= tm:
        tm_eff, B_pad = B, B        # whole batch in one tile: block == full dim,
                                    # no padding, no (8,) divisibility constraint
    else:
        tm_eff = tm
        B_pad = _round_up(B, tm_eff)
        # TODO(synk): replace this pad with the overlapped-last-tile trick
        # (clamped element offsets) to avoid an HBM copy of x for ragged B.
    batch_tiles = B_pad // tm_eff

    # ------------------------- VMEM budget -------------------------
    try:
        vmem_cap = int(getattr(pltpu.get_tpu_info(), "vmem_capacity_bytes",
                               64 << 20))
    except Exception:
        vmem_cap = 64 << 20         # assume the smallest per-core VMEM (v7x)
    budget = int(vmem_cap * 0.75)

    def vmem_use(tn, resident):
        use = (D_in * H * wbytes + H * 4            # w1 + b1 (single-buffered)
               + 2 * tm_eff * D_in * xbytes         # x tile (double-buffered)
               + tm_eff * H * hbytes)               # fc1 activation scratch
        if resident:
            use += H * D_out * wbytes + D_out * 4   # w2 + b2 (single-buffered)
            use += 2 * tm_eff * D_out * obytes      # out tile
        else:
            use += w2_buffers * (H * tn * wbytes + tn * 4)
            use += 2 * tm_eff * tn * obytes
        return use

    resident_ok = (vmem_use(D_out, True) <= budget
                   and (max_tn is None or D_out <= max_tn))

    # ------------------------- output tiling -------------------------
    recompute_h = False
    if (split_small_batch and batch_tiles == 1 and tm_eff % 8 == 0
            and D_out % 256 == 0
            and (max_tn is None or D_out // 2 <= max_tn)
            and vmem_use(D_out // 2, False) <= budget):
        # Small batch: split D_out over two lane-dense tiles on a "parallel"
        # axis so both v7x TensorCores get work; fc1 recomputed per tile
        # (negligible at small B). Same total HBM traffic as resident w2.
        tn_eff = D_out // 2
        D_out_pad = D_out
        recompute_h = True
    elif resident_ok:
        tn_eff = D_out                      # w2 fully resident, fetched once ever
        D_out_pad = D_out
    else:
        # Stream w2 along j (innermost, "arbitrary"); fc1 activation reused via
        # the VMEM scratch across j.
        if tm_eff % 8 != 0:                 # sub-full out blocks need 8-row rows
            B_pad = _round_up(B_pad, 8)
            tm_eff = B_pad if B_pad <= tm else tm
            batch_tiles = B_pad // tm_eff
        cands = [t for t in (4096, 2048, 1024, 512, 256, 128)
                 if vmem_use(t, False) <= budget
                 and (max_tn is None or t <= max_tn)]
        tn_eff = cands[0] if cands else 128
        tn_eff = min(tn_eff, _round_up(D_out, 128))
        D_out_pad = _round_up(D_out, tn_eff)

    n_out_tiles = D_out_pad // tn_eff
    guard_h = (n_out_tiles > 1) and (not recompute_h)

    # ------------------------- padding (demo paths never pad) ----------------
    if B_pad != B:
        x = jnp.pad(x, ((0, B_pad - B), (0, 0)))
    if D_out_pad != D_out:
        # TODO(synk): pre-pad fc2 weights once at parameter setup instead of
        # copying H*D_out bytes through HBM on every call.
        w2_t = jnp.pad(w2_t, ((0, 0), (0, D_out_pad - D_out)))
        b2_2d = jnp.pad(b2_2d, ((0, 0), (0, D_out_pad - D_out)))

    grid = (batch_tiles, n_out_tiles)

    # ------------------------- block specs -------------------------
    x_spec = pl.BlockSpec((tm_eff, D_in), lambda i, j: (i, 0))
    w1_spec = pl.BlockSpec((D_in, H), lambda i, j: (0, 0),
                           pipeline_mode=pl.Buffered(1))
    b1_spec = pl.BlockSpec((1, H), lambda i, j: (0, 0),
                           pipeline_mode=pl.Buffered(1))
    if n_out_tiles == 1:
        w2_spec = pl.BlockSpec((H, D_out_pad), lambda i, j: (0, 0),
                               pipeline_mode=pl.Buffered(1))
        b2_spec = pl.BlockSpec((1, D_out_pad), lambda i, j: (0, 0),
                               pipeline_mode=pl.Buffered(1))
    else:
        w2_spec = pl.BlockSpec((H, tn_eff), lambda i, j: (0, j),
                               pipeline_mode=pl.Buffered(w2_buffers))
        b2_spec = pl.BlockSpec((1, tn_eff), lambda i, j: (0, j))
    out_spec = pl.BlockSpec((tm_eff, tn_eff), lambda i, j: (i, j))

    # j must stay sequential ("arbitrary") whenever the fc1 scratch is reused.
    dim_sem = ("parallel", "parallel") if recompute_h else ("parallel", "arbitrary")

    # ------------------------- cost estimate (advisory) ----------------------
    n_fc1 = batch_tiles * (n_out_tiles if recompute_h else 1)
    flops = 2 * tm_eff * n_fc1 * D_in * H + 2 * B_pad * H * D_out_pad
    w2_passes = batch_tiles if guard_h else 1
    bytes_accessed = (B_pad * D_in * xbytes
                      + D_in * H * wbytes + H * 4
                      + w2_passes * H * D_out_pad * wbytes + D_out_pad * 4
                      + B_pad * D_out_pad * obytes)

    out = pl.pallas_call(
        _make_kernel(guard_h),
        out_shape=jax.ShapeDtypeStruct((B_pad, D_out_pad), x.dtype),
        grid=grid,
        in_specs=[x_spec, w1_spec, b1_spec, w2_spec, b2_spec],
        out_specs=out_spec,
        scratch_shapes=[pltpu.VMEM((tm_eff, H), w2_t.dtype)],
        compiler_params=pltpu.CompilerParams(
            dimension_semantics=dim_sem,
            vmem_limit_bytes=int(vmem_cap * 0.9)),
        cost_estimate=pl.CostEstimate(flops=flops, transcendentals=0,
                                      bytes_accessed=bytes_accessed),
    )(x, w1_t, b1_2d, w2_t, b2_2d)

    return out[:B, :D_out]


def _reference(x, w1_t, b1, w2_t, b2):
    h = x @ w1_t + b1
    h = jnp.where(h > 0, h, 0.01 * h)
    return h @ w2_t + b2


if __name__ == "__main__":
    # Shapes consistent with the module: input_size=128, hidden=512,
    # output=512, batch=8.
    B, D_IN, HID, D_OUT = 8, 128, 512, 512

    key = jax.random.PRNGKey(0)
    kx, kw1, kb1, kw2, kb2 = jax.random.split(key, 5)

    x = jax.random.normal(kx, (B, D_IN), dtype=jnp.float32)
    # PyTorch shapes: fc1.weight (HID, D_IN), fc2.weight (D_OUT, HID);
    # stored pre-transposed so the kernel computes y = x @ W^T + b.
    w1_t = jax.random.normal(kw1, (D_IN, HID), dtype=jnp.float32) * 0.05
    b1 = jax.random.normal(kb1, (HID,), dtype=jnp.float32) * 0.05
    w2_t = jax.random.normal(kw2, (HID, D_OUT), dtype=jnp.float32) * 0.05
    b2 = jax.random.normal(kb2, (D_OUT,), dtype=jnp.float32) * 0.05

    ref = _reference(x, w1_t, b1, w2_t, b2)

    # Default path: small batch -> D_out split into two parallel lane-dense
    # tiles (uses both v7x TensorCores), fc1 recomputed per tile. Exact f32.
    out_f32 = jax.block_until_ready(watermark_insert(x, w1_t, b1, w2_t, b2))
    assert out_f32.shape == (B, D_OUT)
    assert jnp.allclose(out_f32, ref, atol=1e-4, rtol=1e-4)

    # bf16 MXU operands + bf16 fc1 scratch, f32 accumulation (all generations).
    out_bf16 = jax.block_until_ready(
        watermark_insert(x, w1_t, b1, w2_t, b2, weight_dtype=jnp.bfloat16))
    assert jnp.allclose(out_bf16, ref, atol=5e-2, rtol=5e-2)

    # Ragged batch (B=13, not a multiple of 8): whole-batch tile + fully
    # resident w2 -> no padding of x or w2 at all.
    x13 = jax.random.normal(kw2, (13, D_IN), dtype=jnp.float32)
    out_13 = jax.block_until_ready(watermark_insert(x13, w1_t, b1, w2_t, b2))
    assert jnp.allclose(out_13, _reference(x13, w1_t, b1, w2_t, b2),
                        atol=1e-4, rtol=1e-4)

    # Multi-batch-tile + streamed-w2 path (forces small tiles) exercising the
    # fc1-activation reuse across the "arbitrary" inner output-tile axis.
    x40 = jax.random.normal(kb2, (40, D_IN), dtype=jnp.float32)
    out_40 = jax.block_until_ready(
        watermark_insert(x40, w1_t, b1, w2_t, b2, tm=16, max_tn=128))
    assert jnp.allclose(out_40, _reference(x40, w1_t, b1, w2_t, b2),
                        atol=1e-4, rtol=1e-4)

    print("KERNEL_OK")
</pallas_src>

<mosaic_0001>
module attributes {stable_mosaic.version = 11 : i64} {
  func.func @kernel(%arg0: i32, %arg1: i32, %arg2: memref<8x128xf32, #tpu.memory_space<vmem>>, %arg3: memref<128x512xf32, #tpu.memory_space<vmem>>, %arg4: memref<1x512xf32, #tpu.memory_space<vmem>>, %arg5: memref<512x256xf32, #tpu.memory_space<vmem>>, %arg6: memref<1x256xf32, #tpu.memory_space<vmem>>, %arg7: memref<8x256xf32, #tpu.memory_space<vmem>>, %arg8: memref<8x512xf32, #tpu.memory_space<vmem>>) attributes {dimension_semantics = [#tpu.dimension_semantics<parallel>, #tpu.dimension_semantics<parallel>], iteration_bounds = array<i64: 1, 2>, scalar_prefetch = 0 : i64, scratch_operands = 1 : i64, tpu.core_type = #tpu.core_type<tc>, window_params = [{transform_indices = @transform_0, window_bounds = array<i64: 8, 128>}, {pipeline_mode = #tpu.pipeline_mode<synchronous>, transform_indices = @transform_1, window_bounds = array<i64: 128, 512>}, {pipeline_mode = #tpu.pipeline_mode<synchronous>, transform_indices = @transform_2, window_bounds = array<i64: 1, 512>}, {pipeline_mode = #tpu.pipeline_mode<double_buffered>, transform_indices = @transform_3, window_bounds = array<i64: 512, 256>}, {transform_indices = @transform_4, window_bounds = array<i64: 1, 256>}, {transform_indices = @transform_5, window_bounds = array<i64: 8, 256>}]} {
    %c0 = arith.constant 0 : index
    %c0_0 = arith.constant 0 : index
    %0 = vector.load %arg2[%c0, %c0_0] : memref<8x128xf32, #tpu.memory_space<vmem>>, vector<8x128xf32>
    %c0_1 = arith.constant 0 : index
    %c0_2 = arith.constant 0 : index
    %1 = vector.load %arg3[%c0_1, %c0_2] : memref<128x512xf32, #tpu.memory_space<vmem>>, vector<128x512xf32>
    %cst = arith.constant dense<0.000000e+00> : vector<8x512xf32>
    %2 = tpu.matmul %0, %1, %cst {dimension_numbers = #tpu.dot_dimension_numbers<[1], [0], [0], [1], [0, 0, 1, 1], [], []>} : vector<8x128xf32>, vector<128x512xf32>, vector<8x512xf32> -> vector<8x512xf32>
    %c0_3 = arith.constant 0 : index
    %c0_4 = arith.constant 0 : index
    %3 = vector.load %arg4[%c0_3, %c0_4] : memref<1x512xf32, #tpu.memory_space<vmem>>, vector<1x512xf32>
    %4 = vector.broadcast %3 : vector<1x512xf32> to vector<8x512xf32>
    %5 = arith.addf %2, %4 : vector<8x512xf32>
    %cst_5 = arith.constant 0.000000e+00 : f32
    %6 = vector.broadcast %cst_5 : f32 to vector<8x512xf32>
    %7 = arith.cmpf ogt, %5, %6 : vector<8x512xf32>
    %cst_6 = arith.constant 0.00999999977 : f32
    %8 = vector.broadcast %cst_6 : f32 to vector<8x512xf32>
    %9 = arith.mulf %8, %5 : vector<8x512xf32>
    %10 = arith.select %7, %5, %9 : vector<8x512xi1>, vector<8x512xf32>
    %c0_7 = arith.constant 0 : index
    %c0_8 = arith.constant 0 : index
    %11 = vector.load %arg8[%c0_7, %c0_8] : memref<8x512xf32, #tpu.memory_space<vmem>>, vector<8x512xf32>
    tpu.vector_store %arg8[%c0_7, %c0_8], %10 {strides = array<i32>} : memref<8x512xf32, #tpu.memory_space<vmem>>, vector<8x512xf32>,
    %c0_9 = arith.constant 0 : index
    %c0_10 = arith.constant 0 : index
    %12 = vector.load %arg8[%c0_9, %c0_10] : memref<8x512xf32, #tpu.memory_space<vmem>>, vector<8x512xf32>
    %c0_11 = arith.constant 0 : index
    %c0_12 = arith.constant 0 : index
    %13 = vector.load %arg5[%c0_11, %c0_12] : memref<512x256xf32, #tpu.memory_space<vmem>>, vector<512x256xf32>
    %cst_13 = arith.constant dense<0.000000e+00> : vector<8x256xf32>
    %14 = tpu.matmul %12, %13, %cst_13 {dimension_numbers = #tpu.dot_dimension_numbers<[1], [0], [0], [1], [0, 0, 1, 1], [], []>} : vector<8x512xf32>, vector<512x256xf32>, vector<8x256xf32> -> vector<8x256xf32>
    %c0_14 = arith.constant 0 : index
    %c0_15 = arith.constant 0 : index
    %15 = vector.load %arg6[%c0_14, %c0_15] : memref<1x256xf32, #tpu.memory_space<vmem>>, vector<1x256xf32>
    %16 = vector.broadcast %15 : vector<1x256xf32> to vector<8x256xf32>
    %17 = arith.addf %14, %16 : vector<8x256xf32>
    %c0_16 = arith.constant 0 : index
    %c0_17 = arith.constant 0 : index
    %18 = vector.load %arg7[%c0_16, %c0_17] : memref<8x256xf32, #tpu.memory_space<vmem>>, vector<8x256xf32>
    tpu.vector_store %arg7[%c0_16, %c0_17], %17 {strides = array<i32>} : memref<8x256xf32, #tpu.memory_space<vmem>>, vector<8x256xf32>,
    return
  }
  func.func @transform_0(%arg0: i32, %arg1: i32) -> (i32, i32) {
    %c0_i32 = arith.constant 0 : i32
    %c0_i32_0 = arith.constant 0 : i32
    return %arg0, %c0_i32 : i32, i32
  }
  func.func @transform_1(%arg0: i32, %arg1: i32) -> (i32, i32) {
    %c0_i32 = arith.constant 0 : i32
    %c0_i32_0 = arith.constant 0 : i32
    %c0_i32_1 = arith.constant 0 : i32
    return %c0_i32, %c0_i32_0 : i32, i32
  }
  func.func @transform_2(%arg0: i32, %arg1: i32) -> (i32, i32) {
    %c0_i32 = arith.constant 0 : i32
    %c0_i32_0 = arith.constant 0 : i32
    %c0_i32_1 = arith.constant 0 : i32
    return %c0_i32, %c0_i32_0 : i32, i32
  }
  func.func @transform_3(%arg0: i32, %arg1: i32) -> (i32, i32) {
    %c0_i32 = arith.constant 0 : i32
    %c0_i32_0 = arith.constant 0 : i32
    return %c0_i32, %arg1 : i32, i32
  }
  func.func @transform_4(%arg0: i32, %arg1: i32) -> (i32, i32) {
    %c0_i32 = arith.constant 0 : i32
    %c0_i32_0 = arith.constant 0 : i32
    return %c0_i32, %arg1 : i32, i32
  }
  func.func @transform_5(%arg0: i32, %arg1: i32) -> (i32, i32) {
    %c0_i32 = arith.constant 0 : i32
    return %arg0, %arg1 : i32, i32
  }
}

</mosaic_0001>

<llo_original>
// kernel: tpu_custom_call.1
$region0: #{tpu_custom_call.1}
  #allocation0 [shape = 'u32[]', space=smem, size = 0x4, offset = 0x4, fixed_abs, tag = 'smem constant byte address 0x4 - core index']
  #allocation1 [shape = 'u32[72,128]{1,0:T(1,128)}', space=vmem, size = 0x9000, scoped, tag = 'internal scratch']
  #allocation2 [shape = 'f32[8,512]{1,0:T(8,128)}', space=vmem, size = 0x4000, scoped, tag = 'scratch operand']
  %s0 = inlined_call_operand.hbm [shape: f32[8,128], index: 0, kind: input, shape index: {}]
  %s1 = inlined_call_operand.hbm [shape: f32[128,512], index: 1, kind: input, shape index: {}]
  %s2 = inlined_call_operand.hbm [shape: f32[1,512], index: 2, kind: input, shape index: {}]
  %s3 = inlined_call_operand.hbm [shape: f32[512,512], index: 3, kind: input, shape index: {}]
  %s4 = inlined_call_operand.hbm [shape: f32[1,512], index: 4, kind: input, shape index: {}]
  %s5 = inlined_call_operand.hbm [shape: f32[8,512], index: 5, kind: output, shape index: {}]
  %s6 = sld [smem:[#allocation0]]
  $region73: #{tpu_custom_call.1} parent=0
    _
  %s8 = ssub.s32 1, %s6
  %s9 = scalar_select 0, %s8, %s6
  $region1: #{tpu_custom_call.1} parent=0
    #allocation3 [shape = 'u8[4096]{0}', space=vmem, size = 0x1000, scoped, tag = 'input window, operand 0, single buffered']
    #allocation4 [shape = 's32[2]{0}', space=sflag, size = 0x8, scoped, tag = 'scoped memory for tpu_custom_call.1']
    #allocation5 [shape = 's32[2]{0}', space=sflag, size = 0x8, scoped, tag = 'scoped memory for tpu_custom_call.1']
    #allocation6 [shape = 'u8[262144]{0}', space=vmem, size = 0x40000, scoped, tag = 'input window, operand 1, single buffered']
    #allocation7 [shape = 's32[1]{0}', space=sflag, size = 0x4, scoped, tag = 'scoped memory for tpu_custom_call.1']
    #allocation8 [shape = 'u8[2048]{0}', space=vmem, size = 0x800, scoped, tag = 'input window, operand 2, single buffered']
    #allocation9 [shape = 'u8[1048576]{0}', space=vmem, size = 0x100000, scoped, tag = 'input window, operand 3']
    #allocation10 [shape = 's32[2]{0}', space=sflag, size = 0x8, scoped, tag = 'scoped memory for tpu_custom_call.1']
    #allocation11 [shape = 'u8[2048]{0}', space=vmem, size = 0x800, scoped, tag = 'input window, operand 4']
    #allocation12 [shape = 'u8[16384]{0}', space=vmem, size = 0x4000, scoped, tag = 'output window, operand 0']
    %10 = vsyncpa [#allocation4], 0
    %11 = vsyncpa [#allocation7], 0
    %12 = vsyncpa [#allocation10], 0
    %s13 = scalar_lea.sflag [#allocation10], 1
    %14 = vsyncpa %s13, 0
    %15 = vsyncpa [#allocation5], 0
    %s16 = scalar_lea.sflag [#allocation5], 1
    %17 = vsyncpa %s16, 0
    loop: start=0, step=1, limit=4
    $region2: #{tpu_custom_call.1} parent=1 // loop_pre_header
      _
    $region3: #{tpu_custom_call.1} parent=1 // loop_header
      %s19 = sphi 0, %s23
      %p20 = scmp.ge.s32.totalorder %s19, 4
      %s26 = sphi 0, %s38
      %s27 = sphi 0, %s34
      %s28 = sphi 0, %s26
      %s29 = sphi 0, %s27
      %s30 = sphi 0, %s28
      %s31 = sphi 0, %s29
      %s41 = sphi 0, %s43
      %s44 = sphi 0, %s41
      %s45 = sphi 0, %s44
      %s61 = sphi 0, %s45
      %s65 = sphi 0, %s65
      %s67 = sphi 0, %s65
      %s68 = sphi 0, %s67
      %s82 = sphi 0, %s68
      %s86 = sphi 0, %s86
      %s88 = sphi 0, %s86
      %s89 = sphi 0, %s88
      %s103 = sphi 0, %s89
      %s109 = sphi 0, %s111
      %s112 = sphi 0, %s109
      %s113 = sphi 0, %s112
      %s129 = sphi 0, %s113
      %s135 = sphi 0, %s137
      %s138 = sphi 0, %s135
      %s139 = sphi 0, %s138
      %s155 = sphi 0, %s139
      %s163 = sphi 0, %s165
      %s166 = sphi 0, %s163
      %s167 = sphi 0, %s166
      %s183 = sphi 0, %s167
    $region4: #{tpu_custom_call.1} parent=1 // loop_header_branch
      %22 = sbr.rel (%p20) target = $region8
    $region5: #{tpu_custom_call.1} parent=1 // loop_body
      %s24 = ssub.s32 %s19, 1
      %s25 = ssub.s32 %s19, 2
      %s32 = sadd.s32 1, %s27
      %p33 = scmp.ge.s32.totalorder %s32, 2
      %s34 = scalar_select %p33, 0, %s32
      %s35 = sadd.s32 1, %s26
      %s36 = scalar_select %p33, %s35, %s26
      %p37 = scmp.ge.s32.totalorder %s36, 1
      %s38 = scalar_select %p37, 0, %s36
      %s39 = ssub.s32 %s26, %s38
      %p40 = scmp.eq.s32.totalorder %s39, 0
      %s42 = sadd.s32 %s41, 1
      %s43 = scalar_select %p40, %s41, %s42
      %p46 = pneg %p40
      %p47 = scmp.eq.s32.totalorder %s19, 1
      %p48 = por %p46, %p47
      %p49 = scmp.ne.s32.totalorder %s41, %s44
      %p50 = scmp.eq.s32.totalorder %s19, 0
      %p51 = por %p49, %p50
      %p52 = scmp.ne.s32.totalorder %s41, %s44
      %p53 = scmp.eq.s32.totalorder %s24, 1
      %p54 = por %p52, %p53
      %p55 = scmp.ne.s32.totalorder %s44, %s45
      %p56 = scmp.eq.s32.totalorder %s24, 0
      %p57 = por %p55, %p56
      %p58 = scmp.ne.s32.totalorder %s44, %s45
      %p59 = scmp.eq.s32.totalorder %s25, 1
      %p60 = por %p58, %p59
      %p62 = scmp.ne.s32.totalorder %s45, %s61
      %p63 = scmp.eq.s32.totalorder %s25, 0
      %p64 = por %p62, %p63
      %s66 = sadd.s32 %s65, 1
      %p69 = scmp.eq.s32.totalorder %s19, 1
      %p70 = scmp.ne.s32.totalorder %s65, %s67
      %p71 = scmp.eq.s32.totalorder %s19, 0
      %p72 = por %p70, %p71
      %p73 = scmp.ne.s32.totalorder %s65, %s67
      %p74 = scmp.eq.s32.totalorder %s24, 1
      %p75 = por %p73, %p74
      %p76 = scmp.ne.s32.totalorder %s67, %s68
      %p77 = scmp.eq.s32.totalorder %s24, 0
      %p78 = por %p76, %p77
      %p79 = scmp.ne.s32.totalorder %s67, %s68
      %p80 = scmp.eq.s32.totalorder %s25, 1
      %p81 = por %p79, %p80
      %p83 = scmp.ne.s32.totalorder %s68, %s82
      %p84 = scmp.eq.s32.totalorder %s25, 0
      %p85 = por %p83, %p84
      %s87 = sadd.s32 %s86, 1
      %p90 = scmp.eq.s32.totalorder %s19, 1
      %p91 = scmp.ne.s32.totalorder %s86, %s88
      %p92 = scmp.eq.s32.totalorder %s19, 0
      %p93 = por %p91, %p92
      %p94 = scmp.ne.s32.totalorder %s86, %s88
      %p95 = scmp.eq.s32.totalorder %s24, 1
      %p96 = por %p94, %p95
      %p97 = scmp.ne.s32.totalorder %s88, %s89
      %p98 = scmp.eq.s32.totalorder %s24, 0
      %p99 = por %p97, %p98
      %p100 = scmp.ne.s32.totalorder %s88, %s89
      %p101 = scmp.eq.s32.totalorder %s25, 1
      %p102 = por %p100, %p101
      %p104 = scmp.ne.s32.totalorder %s89, %s103
      %p105 = scmp.eq.s32.totalorder %s25, 0
      %p106 = por %p104, %p105
      %s107 = ssub.s32 %s27, %s34
      %p108 = scmp.eq.s32.totalorder %s107, 0
      %s110 = sadd.s32 %s109, 1
      %s111 = scalar_select %p108, %s109, %s110
      %p114 = pneg %p108
      %p115 = scmp.eq.s32.totalorder %s19, 1
      %p116 = por %p114, %p115
      %p117 = scmp.ne.s32.totalorder %s109, %s112
      %p118 = scmp.eq.s32.totalorder %s19, 0
      %p119 = por %p117, %p118
      %p120 = scmp.ne.s32.totalorder %s109, %s112
      %p121 = scmp.eq.s32.totalorder %s24, 1
      %p122 = por %p120, %p121
      %p123 = scmp.ne.s32.totalorder %s112, %s113
      %p124 = scmp.eq.s32.totalorder %s24, 0
      %p125 = por %p123, %p124
      %p126 = scmp.ne.s32.totalorder %s112, %s113
      %p127 = scmp.eq.s32.totalorder %s25, 1
      %p128 = por %p126, %p127
      %p130 = scmp.ne.s32.totalorder %s113, %s129
      %p131 = scmp.eq.s32.totalorder %s25, 0
      %p132 = por %p130, %p131
      %s133 = ssub.s32 %s27, %s34
      %p134 = scmp.eq.s32.totalorder %s133, 0
      %s136 = sadd.s32 %s135, 1
      %s137 = scalar_select %p134, %s135, %s136
      %p140 = pneg %p134
      %p141 = scmp.eq.s32.totalorder %s19, 1
      %p142 = por %p140, %p141
      %p143 = scmp.ne.s32.totalorder %s135, %s138
      %p144 = scmp.eq.s32.totalorder %s19, 0
      %p145 = por %p143, %p144
      %p146 = scmp.ne.s32.totalorder %s135, %s138
      %p147 = scmp.eq.s32.totalorder %s24, 1
      %p148 = por %p146, %p147
      %p149 = scmp.ne.s32.totalorder %s138, %s139
      %p150 = scmp.eq.s32.totalorder %s24, 0
      %p151 = por %p149, %p150
      %p152 = scmp.ne.s32.totalorder %s138, %s139
      %p153 = scmp.eq.s32.totalorder %s25, 1
      %p154 = por %p152, %p153
      %p156 = scmp.ne.s32.totalorder %s139, %s155
      %p157 = scmp.eq.s32.totalorder %s25, 0
      %p158 = por %p156, %p157
      %s159 = ssub.s32 %s26, %s38
      %s160 = ssub.s32 %s27, %s34
      %s161 = sor.u32 %s159, %s160
      %p162 = scmp.eq.s32.totalorder %s161, 0
      %s164 = sadd.s32 %s163, 1
      %s165 = scalar_select %p162, %s163, %s164
      %p168 = pneg %p162
      %p169 = scmp.eq.s32.totalorder %s19, 1
      %p170 = por %p168, %p169
      %p171 = scmp.ne.s32.totalorder %s163, %s166
      %p172 = scmp.eq.s32.totalorder %s19, 0
      %p173 = por %p171, %p172
      %p174 = scmp.ne.s32.totalorder %s163, %s166
      %p175 = scmp.eq.s32.totalorder %s24, 1
      %p176 = por %p174, %p175
      %p177 = scmp.ne.s32.totalorder %s166, %s167
      %p178 = scmp.eq.s32.totalorder %s24, 0
      %p179 = por %p177, %p178
      %p180 = scmp.ne.s32.totalorder %s166, %s167
      %p181 = scmp.eq.s32.totalorder %s25, 1
      %p182 = por %p180, %p181
      %p184 = scmp.ne.s32.totalorder %s167, %s183
      %p185 = scmp.eq.s32.totalorder %s25, 0
      %p186 = por %p184, %p185
      %p187 = scmp.le.s32.totalorder 1, %s19
      %p188 = scmp.lt.s32.totalorder %s19, 3
      %p189 = pnand %p187, %p188
      %p190 = pneg %p189
      // Predicated region
      $region9: #{tpu_custom_call.1} parent=5 // pred_check
        _
      $region10: #{tpu_custom_call.1} parent=5 // pred_check_branch
        %192 = sbr.rel (%p189) target = $region12
      $region11: #{tpu_custom_call.1} parent=5 // pred_region
        %s193 = ssub.s32 %s19, 1
        // Predicated region
        $region13: #{tpu_custom_call.1} parent=11 // pred_check
          %p194 = pneg %p57
        $region14: #{tpu_custom_call.1} parent=11 // pred_check_branch
          %196 = sbr.rel (%p194) target = $region16
        $region15: #{tpu_custom_call.1} parent=11 // pred_region
          %198 = vsyncadd [#allocation4], 0
          %s199 = smul.addr %s28, 8
          %s200 = scalar_lea.hbm %s0, %s199
          %s202 = sshll.u32 %s200, 4
          %s203 = int_to_ptr.hbm [resolvable:$true] %s202
          %s204 = sshll.u32 [#allocation3], 4
          %s205 = int_to_ptr.vmem [resolvable:$true] %s204
          %207 = dma.hbm_to_vmem [thread:$0]  %s203, 128, %s205, [#allocation4]
        $region16: #{tpu_custom_call.1} parent=11 // pred_fallthru
          _
        // Predicated region
        $region17: #{tpu_custom_call.1} parent=11 // pred_check
          %p208 = pneg %p78
        $region18: #{tpu_custom_call.1} parent=11 // pred_check_branch
          %210 = sbr.rel (%p208) target = $region20
        $region19: #{tpu_custom_call.1} parent=11 // pred_region
          %212 = vsyncadd [#allocation7], 0
          %s213 = sshll.u32 %s1, 4
          %s214 = int_to_ptr.hbm [resolvable:$true] %s213
          %s215 = sshll.u32 [#allocation6], 4
          %s216 = int_to_ptr.vmem [resolvable:$true] %s215
          %221 = dma.hbm_to_vmem [thread:$0]  %s214, 8192, %s216, [#allocation7], 512, 512, 32
        $region20: #{tpu_custom_call.1} parent=11 // pred_fallthru
          _
        // Predicated region
        $region21: #{tpu_custom_call.1} parent=11 // pred_check
          %p222 = pneg %p99
        $region22: #{tpu_custom_call.1} parent=11 // pred_check_branch
          %224 = sbr.rel (%p222) target = $region24
        $region23: #{tpu_custom_call.1} parent=11 // pred_region
          %226 = vsyncadd [#allocation7], 0
          %s228 = sshll.u32 %s2, 4
          %s229 = int_to_ptr.hbm [resolvable:$true] %s228
          %s230 = sshll.u32 [#allocation8], 4
          %s231 = int_to_ptr.vmem [resolvable:$true] %s230
          %233 = dma.hbm_to_vmem [thread:$0]  %s229, 64, %s231, [#allocation7]
        $region24: #{tpu_custom_call.1} parent=11 // pred_fallthru
          _
      $region12: #{tpu_custom_call.1} parent=5 // pred_fallthru
        _
      %p234 = scmp.lt.s32.totalorder %s19, 2
      // Predicated region
      $region25: #{tpu_custom_call.1} parent=5 // pred_check
        %p235 = pneg %p234
      $region26: #{tpu_custom_call.1} parent=5 // pred_check_branch
        %237 = sbr.rel (%p235) target = $region28
      $region27: #{tpu_custom_call.1} parent=5 // pred_region
        // Predicated region
        $region29: #{tpu_custom_call.1} parent=27 // pred_check
          %p238 = pneg %p119
        $region30: #{tpu_custom_call.1} parent=27 // pred_check_branch
          %240 = sbr.rel (%p238) target = $region32
        $region31: #{tpu_custom_call.1} parent=27 // pred_region
          %s241 = sand.u32 %s19, 1
          %s242 = scalar_lea.sflag [#allocation10], %s241
          %s243 = sand.u32 %s109, 1
          %s244 = smul.addr %s243, 1024
          %s245 = scalar_lea.vmem [#allocation9], %s244
          %s246 = smul.u32 2, %s27
          %248 = vsyncadd %s242, 0
          %s249 = smul.addr %s246, 8
          %s250 = scalar_lea.hbm %s3, %s249
          %s251 = sshll.u32 %s250, 4
          %s252 = int_to_ptr.hbm [resolvable:$true] %s251
          %s253 = sshll.u32 %s245, 4
          %s254 = int_to_ptr.vmem [resolvable:$true] %s253
          %259 = dma.hbm_to_vmem [thread:$0]  %s252, 16384, %s254, %s242, 512, 256, 16
        $region32: #{tpu_custom_call.1} parent=27 // pred_fallthru
          _
        // Predicated region
        $region33: #{tpu_custom_call.1} parent=27 // pred_check
          %p260 = pneg %p145
        $region34: #{tpu_custom_call.1} parent=27 // pred_check_branch
          %262 = sbr.rel (%p260) target = $region36
        $region35: #{tpu_custom_call.1} parent=27 // pred_region
          %s263 = sand.u32 %s19, 1
          %s264 = scalar_lea.sflag [#allocation10], %s263
          %s265 = sand.u32 %s135, 1
          %s266 = smul.addr %s265, 2
          %s267 = scalar_lea.vmem [#allocation11], %s266
          %s268 = smul.u32 2, %s27
          %270 = vsyncadd %s264, 0
          %s271 = scalar_lea.hbm %s4, %s268
          %s273 = sshll.u32 %s271, 4
          %s274 = int_to_ptr.hbm [resolvable:$true] %s273
          %s275 = sshll.u32 %s267, 4
          %s276 = int_to_ptr.vmem [resolvable:$true] %s275
          %278 = dma.hbm_to_vmem [thread:$0]  %s274, 32, %s276, %s264
        $region36: #{tpu_custom_call.1} parent=27 // pred_fallthru
          _
      $region28: #{tpu_custom_call.1} parent=5 // pred_fallthru
        _
      %p279 = scmp.le.s32.totalorder 1, %s19
      %p280 = scmp.lt.s32.totalorder %s19, 3
      %p281 = pnand %p279, %p280
      %p282 = pneg %p281
      // Predicated region
      $region37: #{tpu_custom_call.1} parent=5 // pred_check
        _
      $region38: #{tpu_custom_call.1} parent=5 // pred_check_branch
        %284 = sbr.rel (%p281) target = $region40
      $region39: #{tpu_custom_call.1} parent=5 // pred_region
        %s285 = ssub.s32 %s19, 1
        // Predicated region
        $region41: #{tpu_custom_call.1} parent=39 // pred_check
          %p286 = pneg %p57
        $region42: #{tpu_custom_call.1} parent=39 // pred_check_branch
          %288 = sbr.rel (%p286) target = $region44
        $region43: #{tpu_custom_call.1} parent=39 // pred_region
          %290 = dma.done [#allocation4], 128
        $region44: #{tpu_custom_call.1} parent=39 // pred_fallthru
          _
        // Predicated region
        $region45: #{tpu_custom_call.1} parent=39 // pred_check
          %p291 = pneg %p78
        $region46: #{tpu_custom_call.1} parent=39 // pred_check_branch
          %293 = sbr.rel (%p291) target = $region48
        $region47: #{tpu_custom_call.1} parent=39 // pred_region
          %295 = dma.done [#allocation7], 8192
        $region48: #{tpu_custom_call.1} parent=39 // pred_fallthru
          _
        // Predicated region
        $region49: #{tpu_custom_call.1} parent=39 // pred_check
          %p296 = pneg %p99
        $region50: #{tpu_custom_call.1} parent=39 // pred_check_branch
          %298 = sbr.rel (%p296) target = $region52
        $region51: #{tpu_custom_call.1} parent=39 // pred_region
          %300 = dma.done [#allocation7], 64
        $region52: #{tpu_custom_call.1} parent=39 // pred_fallthru
          _
        %s301 = sand.u32 %s24, 1
        %s302 = scalar_lea.sflag [#allocation10], %s301
        %s303 = sand.u32 %s112, 1
        %s304 = smul.addr %s303, 1024
        %s305 = scalar_lea.vmem [#allocation9], %s304
        // Predicated region
        $region53: #{tpu_custom_call.1} parent=39 // pred_check
          %p306 = pneg %p125
        $region54: #{tpu_custom_call.1} parent=39 // pred_check_branch
          %308 = sbr.rel (%p306) target = $region56
        $region55: #{tpu_custom_call.1} parent=39 // pred_region
          %310 = dma.done %s302, 16384
        $region56: #{tpu_custom_call.1} parent=39 // pred_fallthru
          _
        %s311 = sand.u32 %s24, 1
        %s312 = scalar_lea.sflag [#allocation10], %s311
        %s313 = sand.u32 %s138, 1
        %s314 = smul.addr %s313, 2
        %s315 = scalar_lea.vmem [#allocation11], %s314
        // Predicated region
        $region57: #{tpu_custom_call.1} parent=39 // pred_check
          %p316 = pneg %p151
        $region58: #{tpu_custom_call.1} parent=39 // pred_check_branch
          %318 = sbr.rel (%p316) target = $region60
        $region59: #{tpu_custom_call.1} parent=39 // pred_region
          %320 = dma.done %s312, 32
        $region60: #{tpu_custom_call.1} parent=39 // pred_fallthru
          _
        %p321 = pneg %p57
        %p322 = pneg %p54
        %p323 = pneg %p78
        %p324 = pneg %p75
        %p325 = pneg %p99
        %p326 = pneg %p96
        %s327 = sand.u32 %s24, 1
        %s328 = scalar_lea.sflag [#allocation10], %s327
        %s329 = sand.u32 %s112, 1
        %s330 = smul.addr %s329, 1024
        %s331 = scalar_lea.vmem [#allocation9], %s330
        %p332 = pneg %p125
        %p333 = pneg %p122
        %s334 = sand.u32 %s24, 1
        %s335 = scalar_lea.sflag [#allocation10], %s334
        %s336 = sand.u32 %s138, 1
        %s337 = smul.addr %s336, 2
        %s338 = scalar_lea.vmem [#allocation11], %s337
        %p339 = pneg %p151
        %p340 = pneg %p148
        %p341 = pneg %p179
        %p342 = pneg %p176
        %s343 = sand.u32 %s166, 1
        %s344 = scalar_lea.sflag [#allocation5], %s343
        %s345 = sand.u32 %s166, 1
        %s346 = smul.addr %s345, 16
        %s347 = scalar_lea.vmem [#allocation12], %s346
        %s348 = smul.u32 2, %s29
        %s349 = smul.u32 2, %s29
        %s350 = smul.u32 2, %s29
        %v351 = vld [vmem:[#allocation3] sm:$0xff]
        %v352 = vld [vmem:[#allocation6] sm:$0xff]
        %v353 = vld [vmem:[#allocation6 + $0x8] sm:$0xff]
        %v354 = vld [vmem:[#allocation6 + $0x10] sm:$0xff]
        %v355 = vld [vmem:[#allocation6 + $0x18] sm:$0xff]
        %v356 = vld [vmem:[#allocation6 + $0x20] sm:$0xff]
        %v357 = vld [vmem:[#allocation6 + $0x28] sm:$0xff]
        %v358 = vld [vmem:[#allocation6 + $0x30] sm:$0xff]
        %v359 = vld [vmem:[#allocation6 + $0x38] sm:$0xff]
        %v360 = vld [vmem:[#allocation6 + $0x40] sm:$0xff]
        %v361 = vld [vmem:[#allocation6 + $0x48] sm:$0xff]
        %v362 = vld [vmem:[#allocation6 + $0x50] sm:$0xff]
        %v363 = vld [vmem:[#allocation6 + $0x58] sm:$0xff]
        %v364 = vld [vmem:[#allocation6 + $0x60] sm:$0xff]
        %v365 = vld [vmem:[#allocation6 + $0x68] sm:$0xff]
        %v366 = vld [vmem:[#allocation6 + $0x70] sm:$0xff]
        %v367 = vld [vmem:[#allocation6 + $0x78] sm:$0xff]
        %v368 = vld [vmem:[#allocation6 + $0x80] sm:$0xff]
        %v369 = vld [vmem:[#allocation6 + $0x88] sm:$0xff]
        %v370 = vld [vmem:[#allocation6 + $0x90] sm:$0xff]
        %v371 = vld [vmem:[#allocation6 + $0x98] sm:$0xff]
        %v372 = vld [vmem:[#allocation6 + $0xa0] sm:$0xff]
        %v373 = vld [vmem:[#allocation6 + $0xa8] sm:$0xff]
        %v374 = vld [vmem:[#allocation6 + $0xb0] sm:$0xff]
        %v375 = vld [vmem:[#allocation6 + $0xb8] sm:$0xff]
        %v376 = vld [vmem:[#allocation6 + $0xc0] sm:$0xff]
        %v377 = vld [vmem:[#allocation6 + $0xc8] sm:$0xff]
        %v378 = vld [vmem:[#allocation6 + $0xd0] sm:$0xff]
        %v379 = vld [vmem:[#allocation6 + $0xd8] sm:$0xff]
        %v380 = vld [vmem:[#allocation6 + $0xe0] sm:$0xff]
        %v381 = vld [vmem:[#allocation6 + $0xe8] sm:$0xff]
        %v382 = vld [vmem:[#allocation6 + $0xf0] sm:$0xff]
        %v383 = vld [vmem:[#allocation6 + $0xf8] sm:$0xff]
        %v384 = vld [vmem:[#allocation6 + $0x100] sm:$0xff]
        %v385 = vld [vmem:[#allocation6 + $0x108] sm:$0xff]
        %v386 = vld [vmem:[#allocation6 + $0x110] sm:$0xff]
        %v387 = vld [vmem:[#allocation6 + $0x118] sm:$0xff]
        %v388 = vld [vmem:[#allocation6 + $0x120] sm:$0xff]
        %v389 = vld [vmem:[#allocation6 + $0x128] sm:$0xff]
        %v390 = vld [vmem:[#allocation6 + $0x130] sm:$0xff]
        %v391 = vld [vmem:[#allocation6 + $0x138] sm:$0xff]
        %v392 = vld [vmem:[#allocation6 + $0x140] sm:$0xff]
        %v393 = vld [vmem:[#allocation6 + $0x148] sm:$0xff]
        %v394 = vld [vmem:[#allocation6 + $0x150] sm:$0xff]
        %v395 = vld [vmem:[#allocation6 + $0x158] sm:$0xff]
        %v396 = vld [vmem:[#allocation6 + $0x160] sm:$0xff]
        %v397 = vld [vmem:[#allocation6 + $0x168] sm:$0xff]
        %v398 = vld [vmem:[#allocation6 + $0x170] sm:$0xff]
        %v399 = vld [vmem:[#allocation6 + $0x178] sm:$0xff]
        %v400 = vld [vmem:[#allocation6 + $0x180] sm:$0xff]
        %v401 = vld [vmem:[#allocation6 + $0x188] sm:$0xff]
        %v402 = vld [vmem:[#allocation6 + $0x190] sm:$0xff]
        %v403 = vld [vmem:[#allocation6 + $0x198] sm:$0xff]
        %v404 = vld [vmem:[#allocation6 + $0x1a0] sm:$0xff]
        %v405 = vld [vmem:[#allocation6 + $0x1a8] sm:$0xff]
        %v406 = vld [vmem:[#allocation6 + $0x1b0] sm:$0xff]
        %v407 = vld [vmem:[#allocation6 + $0x1b8] sm:$0xff]
        %v408 = vld [vmem:[#allocation6 + $0x1c0] sm:$0xff]
        %v409 = vld [vmem:[#allocation6 + $0x1c8] sm:$0xff]
        %v410 = vld [vmem:[#allocation6 + $0x1d0] sm:$0xff]
        %v411 = vld [vmem:[#allocation6 + $0x1d8] sm:$0xff]
        %v412 = vld [vmem:[#allocation6 + $0x1e0] sm:$0xff]
        %v413 = vld [vmem:[#allocation6 + $0x1e8] sm:$0xff]
        %v414 = vld [vmem:[#allocation6 + $0x1f0] sm:$0xff]
        %v415 = vld [vmem:[#allocation6 + $0x1f8] sm:$0xff]
        %v416 = vld [vmem:[#allocation8] sm:$0xf]
        %v418 = vperm.slane %v416, 0
        %v419 = vperm.slane %v416, 1
        %v420 = vperm.slane %v416, 2
        %v421 = vperm.slane %v416, 3
        %426 = vmatpush.msra.mxu0 %v412
        %427 = vmatpush.msra.mxu0 %v408
        %428 = vmatpush.msra.mxu0 %v404
        %429 = vmatpush.msra.mxu0 %v400
        %430 = vmatpush.msra.mxu0 %v396
        %431 = vmatpush.msra.mxu0 %v392
        %432 = vmatpush.msra.mxu0 %v388
        %433 = vmatpush.msra.mxu0 %v384
        %434 = vmatpush.msra.mxu0 %v380
        %435 = vmatpush.msra.mxu0 %v376
        %436 = vmatpush.msra.mxu0 %v372
        %437 = vmatpush.msra.mxu0 %v368
        %438 = vmatpush.msra.mxu0 %v364
        %439 = vmatpush.msra.mxu0 %v360
        %440 = vmatpush.msra.mxu0 %v356
        %441 = vmatpush.msra.mxu0 %v352
        %442 = vmatmul.f32.gmra.mxu0 %v351
        %v443 = vpop.f32.mrf.mxu0
        %v444 = vadd.f32 %v418, %v443
        %445 = vdwg.mxu0
        %446 = vmatpush.msra.mxu0 %v413
        %447 = vmatpush.msra.mxu0 %v409
        %448 = vmatpush.msra.mxu0 %v405
        %449 = vmatpush.msra.mxu0 %v401
        %450 = vmatpush.msra.mxu0 %v397
        %451 = vmatpush.msra.mxu0 %v393
        %452 = vmatpush.msra.mxu0 %v389
        %453 = vmatpush.msra.mxu0 %v385
        %454 = vmatpush.msra.mxu0 %v381
        %455 = vmatpush.msra.mxu0 %v377
        %456 = vmatpush.msra.mxu0 %v373
        %457 = vmatpush.msra.mxu0 %v369
        %458 = vmatpush.msra.mxu0 %v365
        %459 = vmatpush.msra.mxu0 %v361
        %460 = vmatpush.msra.mxu0 %v357
        %461 = vmatpush.msra.mxu0 %v353
        %462 = vmatmul.f32.gmra.mxu0 %v351
        %v463 = vpop.f32.mrf.mxu0
        %v464 = vadd.f32 %v419, %v463
        %465 = vdwg.mxu0
        %466 = vmatpush.msra.mxu0 %v414
        %467 = vmatpush.msra.mxu0 %v410
        %468 = vmatpush.msra.mxu0 %v406
        %469 = vmatpush.msra.mxu0 %v402
        %470 = vmatpush.msra.mxu0 %v398
        %471 = vmatpush.msra.mxu0 %v394
        %472 = vmatpush.msra.mxu0 %v390
        %473 = vmatpush.msra.mxu0 %v386
        %474 = vmatpush.msra.mxu0 %v382
        %475 = vmatpush.msra.mxu0 %v378
        %476 = vmatpush.msra.mxu0 %v374
        %477 = vmatpush.msra.mxu0 %v370
        %478 = vmatpush.msra.mxu0 %v366
        %479 = vmatpush.msra.mxu0 %v362
        %480 = vmatpush.msra.mxu0 %v358
        %481 = vmatpush.msra.mxu0 %v354
        %482 = vmatmul.f32.gmra.mxu0 %v351
        %v483 = vpop.f32.mrf.mxu0
        %v484 = vadd.f32 %v420, %v483
        %485 = vdwg.mxu0
        %486 = vmatpush.msra.mxu0 %v415
        %487 = vmatpush.msra.mxu0 %v411
        %488 = vmatpush.msra.mxu0 %v407
        %489 = vmatpush.msra.mxu0 %v403
        %490 = vmatpush.msra.mxu0 %v399
        %491 = vmatpush.msra.mxu0 %v395
        %492 = vmatpush.msra.mxu0 %v391
        %493 = vmatpush.msra.mxu0 %v387
        %494 = vmatpush.msra.mxu0 %v383
        %495 = vmatpush.msra.mxu0 %v379
        %496 = vmatpush.msra.mxu0 %v375
        %497 = vmatpush.msra.mxu0 %v371
        %498 = vmatpush.msra.mxu0 %v367
        %499 = vmatpush.msra.mxu0 %v363
        %500 = vmatpush.msra.mxu0 %v359
        %501 = vmatpush.msra.mxu0 %v355
        %502 = vmatmul.f32.gmra.mxu0 %v351
        %v503 = vpop.f32.mrf.mxu0
        %v504 = vadd.f32 %v421, %v503
        %505 = vdwg.mxu0
        %vm506 = vcmp.gt.f32.partialorder %v444, 0.0
        %vm507 = vcmp.gt.f32.partialorder %v464, 0.0
        %vm508 = vcmp.gt.f32.partialorder %v484, 0.0
        %vm509 = vcmp.gt.f32.partialorder %v504, 0.0
        %v510 = vmul.f32 %v444, 0.01
        %v511 = vmul.f32 %v464, 0.01
        %v512 = vmul.f32 %v484, 0.01
        %v513 = vmul.f32 %v504, 0.01
        %v514 = vsel %vm506, %v444, %v510
        %v515 = vsel %vm507, %v464, %v511
        %v516 = vsel %vm508, %v484, %v512
        %v517 = vsel %vm509, %v504, %v513
        %518 = vst [vmem:[#allocation2] sm:$0xff] %v514
        %519 = vst [vmem:[#allocation2 + $0x8] sm:$0xff] %v515
        %520 = vst [vmem:[#allocation2 + $0x10] sm:$0xff] %v516
        %521 = vst [vmem:[#allocation2 + $0x18] sm:$0xff] %v517
        %v522 = vld [vmem:[#allocation2] sm:$0xff]
        %v523 = vld [vmem:[#allocation2 + $0x8] sm:$0xff]
        %v524 = vld [vmem:[#allocation2 + $0x10] sm:$0xff]
        %v525 = vld [vmem:[#allocation2 + $0x18] sm:$0xff]
        %v526 = vld [vmem:[%s305] sm:$0xff]
        %v527 = vld [vmem:[%s305 + $0x8] sm:$0xff]
        %v528 = vld [vmem:[%s305 + $0x10] sm:$0xff]
        %v529 = vld [vmem:[%s305 + $0x18] sm:$0xff]
        %v530 = vld [vmem:[%s305 + $0x20] sm:$0xff]
        %v531 = vld [vmem:[%s305 + $0x28] sm:$0xff]
        %v532 = vld [vmem:[%s305 + $0x30] sm:$0xff]
        %v533 = vld [vmem:[%s305 + $0x38] sm:$0xff]
        %v534 = vld [vmem:[%s305 + $0x40] sm:$0xff]
        %v535 = vld [vmem:[%s305 + $0x48] sm:$0xff]
        %v536 = vld [vmem:[%s305 + $0x50] sm:$0xff]
        %v537 = vld [vmem:[%s305 + $0x58] sm:$0xff]
        %v538 = vld [vmem:[%s305 + $0x60] sm:$0xff]
        %v539 = vld [vmem:[%s305 + $0x68] sm:$0xff]
        %v540 = vld [vmem:[%s305 + $0x70] sm:$0xff]
        %v541 = vld [vmem:[%s305 + $0x78] sm:$0xff]
        %v542 = vld [vmem:[%s305 + $0x80] sm:$0xff]
        %v543 = vld [vmem:[%s305 + $0x88] sm:$0xff]
        %v544 = vld [vmem:[%s305 + $0x90] sm:$0xff]
        %v545 = vld [vmem:[%s305 + $0x98] sm:$0xff]
        %v546 = vld [vmem:[%s305 + $0xa0] sm:$0xff]
        %v547 = vld [vmem:[%s305 + $0xa8] sm:$0xff]
        %v548 = vld [vmem:[%s305 + $0xb0] sm:$0xff]
        %v549 = vld [vmem:[%s305 + $0xb8] sm:$0xff]
        %v550 = vld [vmem:[%s305 + $0xc0] sm:$0xff]
        %v551 = vld [vmem:[%s305 + $0xc8] sm:$0xff]
        %v552 = vld [vmem:[%s305 + $0xd0] sm:$0xff]
        %v553 = vld [vmem:[%s305 + $0xd8] sm:$0xff]
        %v554 = vld [vmem:[%s305 + $0xe0] sm:$0xff]
        %v555 = vld [vmem:[%s305 + $0xe8] sm:$0xff]
        %v556 = vld [vmem:[%s305 + $0xf0] sm:$0xff]
        %v557 = vld [vmem:[%s305 + $0xf8] sm:$0xff]
        %v558 = vld [vmem:[%s305 + $0x100] sm:$0xff]
        %v559 = vld [vmem:[%s305 + $0x108] sm:$0xff]
        %v560 = vld [vmem:[%s305 + $0x110] sm:$0xff]
        %v561 = vld [vmem:[%s305 + $0x118] sm:$0xff]
        %v562 = vld [vmem:[%s305 + $0x120] sm:$0xff]
        %v563 = vld [vmem:[%s305 + $0x128] sm:$0xff]
        %v564 = vld [vmem:[%s305 + $0x130] sm:$0xff]
        %v565 = vld [vmem:[%s305 + $0x138] sm:$0xff]
        %v566 = vld [vmem:[%s305 + $0x140] sm:$0xff]
        %v567 = vld [vmem:[%s305 + $0x148] sm:$0xff]
        %v568 = vld [vmem:[%s305 + $0x150] sm:$0xff]
        %v569 = vld [vmem:[%s305 + $0x158] sm:$0xff]
        %v570 = vld [vmem:[%s305 + $0x160] sm:$0xff]
        %v571 = vld [vmem:[%s305 + $0x168] sm:$0xff]
        %v572 = vld [vmem:[%s305 + $0x170] sm:$0xff]
        %v573 = vld [vmem:[%s305 + $0x178] sm:$0xff]
        %v574 = vld [vmem:[%s305 + $0x180] sm:$0xff]
        %v575 = vld [vmem:[%s305 + $0x188] sm:$0xff]
        %v576 = vld [vmem:[%s305 + $0x190] sm:$0xff]
        %v577 = vld [vmem:[%s305 + $0x198] sm:$0xff]
        %v578 = vld [vmem:[%s305 + $0x1a0] sm:$0xff]
        %v579 = vld [vmem:[%s305 + $0x1a8] sm:$0xff]
        %v580 = vld [vmem:[%s305 + $0x1b0] sm:$0xff]
        %v581 = vld [vmem:[%s305 + $0x1b8] sm:$0xff]
        %v582 = vld [vmem:[%s305 + $0x1c0] sm:$0xff]
        %v583 = vld [vmem:[%s305 + $0x1c8] sm:$0xff]
        %v584 = vld [vmem:[%s305 + $0x1d0] sm:$0xff]
        %v585 = vld [vmem:[%s305 + $0x1d8] sm:$0xff]
        %v586 = vld [vmem:[%s305 + $0x1e0] sm:$0xff]
        %v587 = vld [vmem:[%s305 + $0x1e8] sm:$0xff]
        %v588 = vld [vmem:[%s305 + $0x1f0] sm:$0xff]
        %v589 = vld [vmem:[%s305 + $0x1f8] sm:$0xff]
        %v590 = vld [vmem:[%s305 + $0x200] sm:$0xff]
        %v591 = vld [vmem:[%s305 + $0x208] sm:$0xff]
        %v592 = vld [vmem:[%s305 + $0x210] sm:$0xff]
        %v593 = vld [vmem:[%s305 + $0x218] sm:$0xff]
        %v594 = vld [vmem:[%s305 + $0x220] sm:$0xff]
        %v595 = vld [vmem:[%s305 + $0x228] sm:$0xff]
        %v596 = vld [vmem:[%s305 + $0x230] sm:$0xff]
        %v597 = vld [vmem:[%s305 + $0x238] sm:$0xff]
        %v598 = vld [vmem:[%s305 + $0x240] sm:$0xff]
        %v599 = vld [vmem:[%s305 + $0x248] sm:$0xff]
        %v600 = vld [vmem:[%s305 + $0x250] sm:$0xff]
        %v601 = vld [vmem:[%s305 + $0x258] sm:$0xff]
        %v602 = vld [vmem:[%s305 + $0x260] sm:$0xff]
        %v603 = vld [vmem:[%s305 + $0x268] sm:$0xff]
        %v604 = vld [vmem:[%s305 + $0x270] sm:$0xff]
        %v605 = vld [vmem:[%s305 + $0x278] sm:$0xff]
        %v606 = vld [vmem:[%s305 + $0x280] sm:$0xff]
        %v607 = vld [vmem:[%s305 + $0x288] sm:$0xff]
        %v608 = vld [vmem:[%s305 + $0x290] sm:$0xff]
        %v609 = vld [vmem:[%s305 + $0x298] sm:$0xff]
        %v610 = vld [vmem:[%s305 + $0x2a0] sm:$0xff]
        %v611 = vld [vmem:[%s305 + $0x2a8] sm:$0xff]
        %v612 = vld [vmem:[%s305 + $0x2b0] sm:$0xff]
        %v613 = vld [vmem:[%s305 + $0x2b8] sm:$0xff]
        %v614 = vld [vmem:[%s305 + $0x2c0] sm:$0xff]
        %v615 = vld [vmem:[%s305 + $0x2c8] sm:$0xff]
        %v616 = vld [vmem:[%s305 + $0x2d0] sm:$0xff]
        %v617 = vld [vmem:[%s305 + $0x2d8] sm:$0xff]
        %v618 = vld [vmem:[%s305 + $0x2e0] sm:$0xff]
        %v619 = vld [vmem:[%s305 + $0x2e8] sm:$0xff]
        %v620 = vld [vmem:[%s305 + $0x2f0] sm:$0xff]
        %v621 = vld [vmem:[%s305 + $0x2f8] sm:$0xff]
        %v622 = vld [vmem:[%s305 + $0x300] sm:$0xff]
        %v623 = vld [vmem:[%s305 + $0x308] sm:$0xff]
        %v624 = vld [vmem:[%s305 + $0x310] sm:$0xff]
        %v625 = vld [vmem:[%s305 + $0x318] sm:$0xff]
        %v626 = vld [vmem:[%s305 + $0x320] sm:$0xff]
        %v627 = vld [vmem:[%s305 + $0x328] sm:$0xff]
        %v628 = vld [vmem:[%s305 + $0x330] sm:$0xff]
        %v629 = vld [vmem:[%s305 + $0x338] sm:$0xff]
        %v630 = vld [vmem:[%s305 + $0x340] sm:$0xff]
        %v631 = vld [vmem:[%s305 + $0x348] sm:$0xff]
        %v632 = vld [vmem:[%s305 + $0x350] sm:$0xff]
        %v633 = vld [vmem:[%s305 + $0x358] sm:$0xff]
        %v634 = vld [vmem:[%s305 + $0x360] sm:$0xff]
        %v635 = vld [vmem:[%s305 + $0x368] sm:$0xff]
        %v636 = vld [vmem:[%s305 + $0x370] sm:$0xff]
        %v637 = vld [vmem:[%s305 + $0x378] sm:$0xff]
        %v638 = vld [vmem:[%s305 + $0x380] sm:$0xff]
        %v639 = vld [vmem:[%s305 + $0x388] sm:$0xff]
        %v640 = vld [vmem:[%s305 + $0x390] sm:$0xff]
        %v641 = vld [vmem:[%s305 + $0x398] sm:$0xff]
        %v642 = vld [vmem:[%s305 + $0x3a0] sm:$0xff]
        %v643 = vld [vmem:[%s305 + $0x3a8] sm:$0xff]
        %v644 = vld [vmem:[%s305 + $0x3b0] sm:$0xff]
        %v645 = vld [vmem:[%s305 + $0x3b8] sm:$0xff]
        %v646 = vld [vmem:[%s305 + $0x3c0] sm:$0xff]
        %v647 = vld [vmem:[%s305 + $0x3c8] sm:$0xff]
        %v648 = vld [vmem:[%s305 + $0x3d0] sm:$0xff]
        %v649 = vld [vmem:[%s305 + $0x3d8] sm:$0xff]
        %v650 = vld [vmem:[%s305 + $0x3e0] sm:$0xff]
        %v651 = vld [vmem:[%s305 + $0x3e8] sm:$0xff]
        %v652 = vld [vmem:[%s305 + $0x3f0] sm:$0xff]
        %v653 = vld [vmem:[%s305 + $0x3f8] sm:$0xff]
        %v654 = vld [vmem:[%s315] sm:$0x3]
        %v656 = vperm.slane %v654, 0
        %v657 = vperm.slane %v654, 1
        %660 = vmatpush.msra.mxu0 %v556
        %661 = vmatpush.msra.mxu0 %v554
        %662 = vmatpush.msra.mxu0 %v552
        %663 = vmatpush.msra.mxu0 %v550
        %664 = vmatpush.msra.mxu0 %v548
        %665 = vmatpush.msra.mxu0 %v546
        %666 = vmatpush.msra.mxu0 %v544
        %667 = vmatpush.msra.mxu0 %v542
        %668 = vmatpush.msra.mxu0 %v540
        %669 = vmatpush.msra.mxu0 %v538
        %670 = vmatpush.msra.mxu0 %v536
        %671 = vmatpush.msra.mxu0 %v534
        %672 = vmatpush.msra.mxu0 %v532
        %673 = vmatpush.msra.mxu0 %v530
        %674 = vmatpush.msra.mxu0 %v528
        %675 = vmatpush.msra.mxu0 %v526
        %676 = vmatmul.f32.gmra.mxu0 %v522
        %v677 = vpop.f32.mrf.mxu0
        %v678 = vadd.f32 %v656, %v677
        %679 = vdwg.mxu0
        %680 = vmatpush.msra.mxu0 %v588
        %681 = vmatpush.msra.mxu0 %v586
        %682 = vmatpush.msra.mxu0 %v584
        %683 = vmatpush.msra.mxu0 %v582
        %684 = vmatpush.msra.mxu0 %v580
        %685 = vmatpush.msra.mxu0 %v578
        %686 = vmatpush.msra.mxu0 %v576
        %687 = vmatpush.msra.mxu0 %v574
        %688 = vmatpush.msra.mxu0 %v572
        %689 = vmatpush.msra.mxu0 %v570
        %690 = vmatpush.msra.mxu0 %v568
        %691 = vmatpush.msra.mxu0 %v566
        %692 = vmatpush.msra.mxu0 %v564
        %693 = vmatpush.msra.mxu0 %v562
        %694 = vmatpush.msra.mxu0 %v560
        %695 = vmatpush.msra.mxu0 %v558
        %696 = vmatmul.f32.gmra.mxu0 %v523
        %v697 = vpop.f32.mrf.mxu0
        %v698 = vadd.f32 %v678, %v697
        %699 = vdwg.mxu0
        %700 = vmatpush.msra.mxu0 %v620
        %701 = vmatpush.msra.mxu0 %v618
        %702 = vmatpush.msra.mxu0 %v616
        %703 = vmatpush.msra.mxu0 %v614
        %704 = vmatpush.msra.mxu0 %v612
        %705 = vmatpush.msra.mxu0 %v610
        %706 = vmatpush.msra.mxu0 %v608
        %707 = vmatpush.msra.mxu0 %v606
        %708 = vmatpush.msra.mxu0 %v604
        %709 = vmatpush.msra.mxu0 %v602
        %710 = vmatpush.msra.mxu0 %v600
        %711 = vmatpush.msra.mxu0 %v598
        %712 = vmatpush.msra.mxu0 %v596
        %713 = vmatpush.msra.mxu0 %v594
        %714 = vmatpush.msra.mxu0 %v592
        %715 = vmatpush.msra.mxu0 %v590
        %716 = vmatmul.f32.gmra.mxu0 %v524
        %v717 = vpop.f32.mrf.mxu0
        %v718 = vadd.f32 %v698, %v717
        %719 = vdwg.mxu0
        %720 = vmatpush.msra.mxu0 %v652
        %721 = vmatpush.msra.mxu0 %v650
        %722 = vmatpush.msra.mxu0 %v648
        %723 = vmatpush.msra.mxu0 %v646
        %724 = vmatpush.msra.mxu0 %v644
        %725 = vmatpush.msra.mxu0 %v642
        %726 = vmatpush.msra.mxu0 %v640
        %727 = vmatpush.msra.mxu0 %v638
        %728 = vmatpush.msra.mxu0 %v636
        %729 = vmatpush.msra.mxu0 %v634
        %730 = vmatpush.msra.mxu0 %v632
        %731 = vmatpush.msra.mxu0 %v630
        %732 = vmatpush.msra.mxu0 %v628
        %733 = vmatpush.msra.mxu0 %v626
        %734 = vmatpush.msra.mxu0 %v624
        %735 = vmatpush.msra.mxu0 %v622
        %736 = vmatmul.f32.gmra.mxu0 %v525
        %v737 = vpop.f32.mrf.mxu0
        %v738 = vadd.f32 %v718, %v737
        %739 = vdwg.mxu0
        %740 = vmatpush.msra.mxu0 %v557
        %741 = vmatpush.msra.mxu0 %v555
        %742 = vmatpush.msra.mxu0 %v553
        %743 = vmatpush.msra.mxu0 %v551
        %744 = vmatpush.msra.mxu0 %v549
        %745 = vmatpush.msra.mxu0 %v547
        %746 = vmatpush.msra.mxu0 %v545
        %747 = vmatpush.msra.mxu0 %v543
        %748 = vmatpush.msra.mxu0 %v541
        %749 = vmatpush.msra.mxu0 %v539
        %750 = vmatpush.msra.mxu0 %v537
        %751 = vmatpush.msra.mxu0 %v535
        %752 = vmatpush.msra.mxu0 %v533
        %753 = vmatpush.msra.mxu0 %v531
        %754 = vmatpush.msra.mxu0 %v529
        %755 = vmatpush.msra.mxu0 %v527
        %756 = vmatmul.f32.gmra.mxu0 %v522
        %v757 = vpop.f32.mrf.mxu0
        %v758 = vadd.f32 %v657, %v757
        %759 = vdwg.mxu0
        %760 = vmatpush.msra.mxu0 %v589
        %761 = vmatpush.msra.mxu0 %v587
        %762 = vmatpush.msra.mxu0 %v585
        %763 = vmatpush.msra.mxu0 %v583
        %764 = vmatpush.msra.mxu0 %v581
        %765 = vmatpush.msra.mxu0 %v579
        %766 = vmatpush.msra.mxu0 %v577
        %767 = vmatpush.msra.mxu0 %v575
        %768 = vmatpush.msra.mxu0 %v573
        %769 = vmatpush.msra.mxu0 %v571
        %770 = vmatpush.msra.mxu0 %v569
        %771 = vmatpush.msra.mxu0 %v567
        %772 = vmatpush.msra.mxu0 %v565
        %773 = vmatpush.msra.mxu0 %v563
        %774 = vmatpush.msra.mxu0 %v561
        %775 = vmatpush.msra.mxu0 %v559
        %776 = vmatmul.f32.gmra.mxu0 %v523
        %v777 = vpop.f32.mrf.mxu0
        %v778 = vadd.f32 %v758, %v777
        %779 = vdwg.mxu0
        %780 = vmatpush.msra.mxu0 %v621
        %781 = vmatpush.msra.mxu0 %v619
        %782 = vmatpush.msra.mxu0 %v617
        %783 = vmatpush.msra.mxu0 %v615
        %784 = vmatpush.msra.mxu0 %v613
        %785 = vmatpush.msra.mxu0 %v611
        %786 = vmatpush.msra.mxu0 %v609
        %787 = vmatpush.msra.mxu0 %v607
        %788 = vmatpush.msra.mxu0 %v605
        %789 = vmatpush.msra.mxu0 %v603
        %790 = vmatpush.msra.mxu0 %v601
        %791 = vmatpush.msra.mxu0 %v599
        %792 = vmatpush.msra.mxu0 %v597
        %793 = vmatpush.msra.mxu0 %v595
        %794 = vmatpush.msra.mxu0 %v593
        %795 = vmatpush.msra.mxu0 %v591
        %796 = vmatmul.f32.gmra.mxu0 %v524
        %v797 = vpop.f32.mrf.mxu0
        %v798 = vadd.f32 %v778, %v797
        %799 = vdwg.mxu0
        %800 = vmatpush.msra.mxu0 %v653
        %801 = vmatpush.msra.mxu0 %v651
        %802 = vmatpush.msra.mxu0 %v649
        %803 = vmatpush.msra.mxu0 %v647
        %804 = vmatpush.msra.mxu0 %v645
        %805 = vmatpush.msra.mxu0 %v643
        %806 = vmatpush.msra.mxu0 %v641
        %807 = vmatpush.msra.mxu0 %v639
        %808 = vmatpush.msra.mxu0 %v637
        %809 = vmatpush.msra.mxu0 %v635
        %810 = vmatpush.msra.mxu0 %v633
        %811 = vmatpush.msra.mxu0 %v631
        %812 = vmatpush.msra.mxu0 %v629
        %813 = vmatpush.msra.mxu0 %v627
        %814 = vmatpush.msra.mxu0 %v625
        %815 = vmatpush.msra.mxu0 %v623
        %816 = vmatmul.f32.gmra.mxu0 %v525
        %v817 = vpop.f32.mrf.mxu0
        %v818 = vadd.f32 %v798, %v817
        %819 = vdwg.mxu0
        %820 = vst [vmem:[%s347] sm:$0xff] %v738
        %821 = vst [vmem:[%s347 + $0x8] sm:$0xff] %v818
        %s822 = sand.u32 %s166, 1
        %s823 = scalar_lea.sflag [#allocation5], %s822
        %s824 = sand.u32 %s166, 1
        %s825 = smul.addr %s824, 16
        %s826 = scalar_lea.vmem [#allocation12], %s825
        // Predicated region
        $region61: #{tpu_custom_call.1} parent=39 // pred_check
          %p827 = pneg %p176
        $region62: #{tpu_custom_call.1} parent=39 // pred_check_branch
          %829 = sbr.rel (%p827) target = $region64
        $region63: #{tpu_custom_call.1} parent=39 // pred_region
          %s830 = smul.u32 2, %s29
          %832 = vsyncadd %s823, 0
          %s833 = smul.addr %s28, 4
          %s834 = sadd.s32 %s830, %s833
          %s835 = smul.addr %s834, 8
          %s836 = scalar_lea.hbm %s5, %s835
          %s838 = sshll.u32 %s826, 4
          %s839 = int_to_ptr.vmem [resolvable:$true] %s838
          %s840 = sshll.u32 %s836, 4
          %s841 = int_to_ptr.hbm [resolvable:$true] %s840
          %843 = dma.vmem_to_hbm [thread:$0]  %s839, 256, %s841, %s823
        $region64: #{tpu_custom_call.1} parent=39 // pred_fallthru
          _
      $region40: #{tpu_custom_call.1} parent=5 // pred_fallthru
        _
      %p844 = scmp.le.s32.totalorder 2, %s19
      // Predicated region
      $region65: #{tpu_custom_call.1} parent=5 // pred_check
        %p845 = pneg %p844
      $region66: #{tpu_custom_call.1} parent=5 // pred_check_branch
        %847 = sbr.rel (%p845) target = $region68
      $region67: #{tpu_custom_call.1} parent=5 // pred_region
        %s848 = ssub.s32 %s19, 2
        // Predicated region
        $region69: #{tpu_custom_call.1} parent=67 // pred_check
          %p849 = pneg %p182
        $region70: #{tpu_custom_call.1} parent=67 // pred_check_branch
          %851 = sbr.rel (%p849) target = $region72
        $region71: #{tpu_custom_call.1} parent=67 // pred_region
          %s852 = sand.u32 %s167, 1
          %s853 = scalar_lea.sflag [#allocation5], %s852
          %s854 = sand.u32 %s167, 1
          %s855 = smul.addr %s854, 16
          %s856 = scalar_lea.vmem [#allocation12], %s855
          %858 = dma.done %s853, 256
        $region72: #{tpu_custom_call.1} parent=67 // pred_fallthru
          _
      $region68: #{tpu_custom_call.1} parent=5 // pred_fallthru
        _
    $region6: #{tpu_custom_call.1} parent=1 // loop_footer
      %s23 = sadd.s32 1, %s19
    $region7: #{tpu_custom_call.1} parent=1 // loop_footer_branch
      %18 = sbr.rel target = $region3
    $region8: #{tpu_custom_call.1} parent=1 // loop_exit
      _
    %859 = vsyncpa [#allocation4], 1
    %s860 = scalar_lea.sflag [#allocation4], 1
    %861 = vsyncpa %s860, 1
    %862 = vsyncpa [#allocation7], 1
    %863 = vsyncpa [#allocation10], 1
    %s864 = scalar_lea.sflag [#allocation10], 1
    %865 = vsyncpa %s864, 1
    %866 = vsyncpa [#allocation5], 1
    %s867 = scalar_lea.sflag [#allocation5], 1
    %868 = vsyncpa %s867, 1

</llo_original>
